<compile_context>
chip_gen: v5e
topology: v5e:2x2
jax: 0.10.0
libtpu: 0.0.40
codegen_flags: <defaults>
</compile_context>

<pallas_src>
import jax
import jax.numpy as jnp
from jax.experimental import pallas as pl
from jax.experimental.pallas import tpu as pltpu


# ----------------------------- small helpers --------------------------------

def _silu(x):
    return x * jax.nn.sigmoid(x)


def _round_up(x, m):
    return ((x + m - 1) // m) * m


def _cdiv(a, b):
    return (a + b - 1) // b


def _vmem_capacity_bytes():
    try:
        return int(pltpu.get_tpu_info().vmem_capacity_bytes)
    except Exception:
        # Conservative fallback: v7x per-TensorCore VMEM.
        return 64 << 20


def _pick_tm(E, tmid, nk, w_bytes, x_bytes, out_bytes, vmem_bytes):
    """Largest token tile whose double-buffered working set fits ~80% VMEM."""
    weight_tiles = 2 * (2 * E * tmid + tmid * E) * w_bytes   # w12 + w3, 2-buf
    acc_row = E * 4 if nk > 1 else 0                          # f32 accumulator
    per_row = 2 * E * x_bytes + 2 * E * out_bytes + acc_row   # x + out, 2-buf
    for cand in (1024, 512, 256, 128):
        if weight_tiles + cand * per_row <= 0.80 * vmem_bytes:
            return cand
    return 128


# ------------------------------- kernels -------------------------------------

def glu_kernel_acc(x_ref, w12_ref, w3_ref, o_ref, acc_ref):
    """Mid-tiled variant: f32 accumulator resident across grid axis 1."""
    k = pl.program_id(1)
    cdt = w12_ref.dtype                       # compute dtype (bf16 by default)

    x = x_ref[...].astype(cdt)                # cast in-kernel (hidden by MXU)
    h = jnp.dot(x, w12_ref[...], preferred_element_type=jnp.float32)
    half = h.shape[-1] // 2
    h1 = h[:, :half]                          # W1(x) slice for this Mid tile
    h2 = h[:, half:]                          # W2(x) slice for this Mid tile
    gated = (h1 * jax.nn.sigmoid(h1)) * h2    # silu(h1) * h2
    contrib = jnp.dot(gated.astype(cdt), w3_ref[...],
                      preferred_element_type=jnp.float32)

    @pl.when(k == 0)
    def _():
        acc_ref[...] = contrib                # init with first contribution

    @pl.when(k > 0)
    def _():
        acc_ref[...] += contrib

    @pl.when(k == pl.num_programs(1) - 1)
    def _():
        o_ref[...] = acc_ref[...].astype(o_ref.dtype)


def glu_kernel_single(x_ref, w12_ref, w3_ref, o_ref):
    """nk == 1 specialization: write the output tile directly (no scratch)."""
    cdt = w12_ref.dtype
    x = x_ref[...].astype(cdt)
    h = jnp.dot(x, w12_ref[...], preferred_element_type=jnp.float32)
    half = h.shape[-1] // 2
    h1 = h[:, :half]
    h2 = h[:, half:]
    gated = (h1 * jax.nn.sigmoid(h1)) * h2
    o_ref[...] = jnp.dot(gated.astype(cdt), w3_ref[...],
                         preferred_element_type=jnp.float32).astype(o_ref.dtype)


# --------------------------- parameter conversion ----------------------------

def pack_glu_weights(w1, w2, w3, *, tmid=512, weight_dtype=jnp.bfloat16):
    """One-time weight packing (hoist to param-conversion time in a model).

    w1, w2: (Mid, E); w3: (E, Mid)   -- PyTorch nn.Linear weight layout.
    Returns:
      w12:  (E, 2*Mid_pad)  columns grouped per Mid-tile as [W1_k | W2_k]
      w3t:  (Mid_pad, E)
      tmid: effective hidden-dim tile used for packing.
    Zero-padding Mid up to a multiple of tmid is numerically inert
    (silu(0) * 0 == 0) and keeps the in-kernel h1/h2 lane split aligned.
    """
    Mid, E = w1.shape
    tmid_eff = tmid if Mid > tmid else Mid
    mid_pad = _round_up(Mid, tmid_eff)
    if mid_pad != Mid:
        pad = mid_pad - Mid
        w1 = jnp.pad(w1, ((0, pad), (0, 0)))
        w2 = jnp.pad(w2, ((0, pad), (0, 0)))
        w3 = jnp.pad(w3, ((0, 0), (0, pad)))
    nk = mid_pad // tmid_eff

    w1t = w1.T.astype(weight_dtype)           # (E, Mid_pad)
    w2t = w2.T.astype(weight_dtype)           # (E, Mid_pad)
    w3t = w3.T.astype(weight_dtype)           # (Mid_pad, E)
    w12 = jnp.concatenate(
        [w1t.reshape(E, nk, tmid_eff), w2t.reshape(E, nk, tmid_eff)],
        axis=2).reshape(E, 2 * mid_pad)
    return w12, w3t, tmid_eff


# -------------------------------- forward ------------------------------------

def glu_forward_packed(x, w12, w3t, tmid, *, tm=None):
    """GLU forward with pre-packed weights.

    x:    [B, S, E]   (any float dtype; cast to the weight dtype in-kernel)
    w12:  [E, 2*Mid_pad], w3t: [Mid_pad, E]  from pack_glu_weights().
    tmid: hidden-dim tile used when packing.
    tm:   token tile override (otherwise chosen from the chip's VMEM).
    """
    B, S, E = x.shape
    mid_pad, E2 = w3t.shape
    assert E2 == E and w12.shape == (E, 2 * mid_pad) and mid_pad % tmid == 0
    nk = mid_pad // tmid
    M = B * S

    w_bytes = jnp.dtype(w12.dtype).itemsize
    x_bytes = jnp.dtype(x.dtype).itemsize
    out_bytes = x_bytes
    vmem = _vmem_capacity_bytes()

    if tm is None:
        tm = _pick_tm(E, tmid, nk, w_bytes, x_bytes, out_bytes, vmem)

    # Token-tile sizing (multiple of 16 so bf16 sublane packing stays legal).
    tm_eff = min(tm, _round_up(M, 16))
    # Keep >=2 token tiles when there is enough work so the "parallel" axis
    # can actually split across TensorCores (megacore).
    if M > 256 and _cdiv(M, tm_eff) < 2:
        tm_eff = _round_up(_cdiv(M, 2), 16)
    m_pad = _round_up(M, tm_eff)
    num_m_tiles = m_pad // tm_eff

    x2 = x.reshape(M, E)
    if m_pad != M:
        x2 = jnp.pad(x2, ((0, m_pad - M), (0, 0)))

    # VMEM budget (double-buffered inputs/outputs + f32 accumulator).
    budget = (2 * tm_eff * E * x_bytes
              + 2 * E * 2 * tmid * w_bytes
              + 2 * tmid * E * w_bytes
              + 2 * tm_eff * E * out_bytes
              + (tm_eff * E * 4 if nk > 1 else 0))
    vmem_limit = int(min(max(budget + (8 << 20), 32 << 20), 0.92 * vmem))

    cost = pl.CostEstimate(
        flops=int(6 * M * E * mid_pad),
        transcendentals=int(M * mid_pad),
        bytes_accessed=int(M * E * x_bytes + M * E * out_bytes
                           + num_m_tiles * 3 * E * mid_pad * w_bytes),
    )

    kernel = glu_kernel_acc if nk > 1 else glu_kernel_single
    scratch = [pltpu.VMEM((tm_eff, E), jnp.float32)] if nk > 1 else []

    out = pl.pallas_call(
        kernel,
        out_shape=jax.ShapeDtypeStruct((m_pad, E), x.dtype),
        grid_spec=pltpu.PrefetchScalarGridSpec(
            num_scalar_prefetch=0,
            grid=(num_m_tiles, nk),
            in_specs=[
                pl.BlockSpec((tm_eff, E), lambda i, k: (i, 0)),
                pl.BlockSpec((E, 2 * tmid), lambda i, k: (0, k)),
                pl.BlockSpec((tmid, E), lambda i, k: (k, 0)),
            ],
            out_specs=pl.BlockSpec((tm_eff, E), lambda i, k: (i, 0)),
            scratch_shapes=scratch,
        ),
        compiler_params=pltpu.CompilerParams(
            dimension_semantics=("parallel", "arbitrary"),
            vmem_limit_bytes=vmem_limit),
        cost_estimate=cost,
    )(x2, w12, w3t)

    if m_pad != M:
        out = out[:M]
    return out.reshape(B, S, E)


def glu_forward(x, w1, w2, w3, *, tmid=512, tm=None, weight_dtype=jnp.bfloat16):
    """Convenience wrapper. In a real model, call pack_glu_weights() once at
    parameter-conversion time and reuse glu_forward_packed() per step."""
    w12, w3t, tmid_eff = pack_glu_weights(w1, w2, w3, tmid=tmid,
                                          weight_dtype=weight_dtype)
    return glu_forward_packed(x, w12, w3t, tmid_eff, tm=tm)


# --------------------------------- demo --------------------------------------

if __name__ == "__main__":
    # Small deterministic setup consistent with GLU(embed_dim, mid_dim, "silu")
    batch, seq = 2, 8
    embed_dim, mid_dim = 32, 64

    key = jax.random.PRNGKey(0)
    kx, k1, k2, k3 = jax.random.split(key, 4)

    x = jax.random.normal(kx, (batch, seq, embed_dim), dtype=jnp.float32)
    # nn.Linear weight shapes: (out_features, in_features), bias=False
    w1 = jax.random.normal(k1, (mid_dim, embed_dim), dtype=jnp.float32) * 0.05
    w2 = jax.random.normal(k2, (mid_dim, embed_dim), dtype=jnp.float32) * 0.05
    w3 = jax.random.normal(k3, (embed_dim, mid_dim), dtype=jnp.float32) * 0.05

    # One-time weight packing (default: bf16 compute, f32 accumulation).
    w12, w3t, tmid_eff = pack_glu_weights(w1, w2, w3)

    out = glu_forward_packed(x, w12, w3t, tmid_eff)
    out = jax.block_until_ready(out)

    # Reference in plain JAX (f32).
    ref = (_silu(x @ w1.T) * (x @ w2.T)) @ w3.T
    assert out.shape == ref.shape
    assert jnp.allclose(out, ref, atol=2e-2, rtol=2e-2), "mismatch vs reference"

    print("KERNEL_OK")
</pallas_src>

<mosaic_0001>
module attributes {stable_mosaic.version = 11 : i64} {
  func.func @glu_kernel_single(%arg0: i32, %arg1: i32, %arg2: memref<16x32xf32, #tpu.memory_space<vmem>>, %arg3: memref<32x128xbf16, #tpu.memory_space<vmem>>, %arg4: memref<64x32xbf16, #tpu.memory_space<vmem>>, %arg5: memref<16x32xf32, #tpu.memory_space<vmem>>) attributes {dimension_semantics = [#tpu.dimension_semantics<parallel>, #tpu.dimension_semantics<arbitrary>], iteration_bounds = array<i64: 1, 1>, scalar_prefetch = 0 : i64, scratch_operands = 0 : i64, tpu.core_type = #tpu.core_type<tc>, window_params = [{transform_indices = @transform_0, window_bounds = array<i64: 16, 32>}, {transform_indices = @transform_1, window_bounds = array<i64: 32, 128>}, {transform_indices = @transform_2, window_bounds = array<i64: 64, 32>}, {transform_indices = @transform_3, window_bounds = array<i64: 16, 32>}]} {
    %c0 = arith.constant 0 : index
    %c0_0 = arith.constant 0 : index
    %0 = vector.load %arg2[%c0, %c0_0] : memref<16x32xf32, #tpu.memory_space<vmem>>, vector<16x32xf32>
    %1 = arith.truncf %0 : vector<16x32xf32> to vector<16x32xbf16>
    %c0_1 = arith.constant 0 : index
    %c0_2 = arith.constant 0 : index
    %2 = vector.load %arg3[%c0_1, %c0_2] : memref<32x128xbf16, #tpu.memory_space<vmem>>, vector<32x128xbf16>
    %cst = arith.constant dense<0.000000e+00> : vector<16x128xf32>
    %3 = tpu.matmul %1, %2, %cst {dimension_numbers = #tpu.dot_dimension_numbers<[1], [0], [0], [1], [0, 0, 1, 1], [], []>} : vector<16x32xbf16>, vector<32x128xbf16>, vector<16x128xf32> -> vector<16x128xf32>
    %4 = vector.extract_strided_slice %3 {offsets = [0, 0], sizes = [16, 64], strides = [1, 1]} : vector<16x128xf32> to vector<16x64xf32>
    %5 = vector.extract_strided_slice %3 {offsets = [0, 64], sizes = [16, 64], strides = [1, 1]} : vector<16x128xf32> to vector<16x64xf32>
    %6 = arith.negf %4 : vector<16x64xf32>
    %7 = math.exp %6 : vector<16x64xf32>
    %cst_3 = arith.constant 1.000000e+00 : f32
    %8 = vector.broadcast %cst_3 : f32 to vector<16x64xf32>
    %9 = arith.addf %8, %7 : vector<16x64xf32>
    %10 = arith.divf %8, %9 : vector<16x64xf32>
    %11 = arith.mulf %4, %10 : vector<16x64xf32>
    %12 = arith.mulf %11, %5 : vector<16x64xf32>
    %13 = arith.truncf %12 : vector<16x64xf32> to vector<16x64xbf16>
    %c0_4 = arith.constant 0 : index
    %c0_5 = arith.constant 0 : index
    %14 = vector.load %arg4[%c0_4, %c0_5] : memref<64x32xbf16, #tpu.memory_space<vmem>>, vector<64x32xbf16>
    %cst_6 = arith.constant dense<0.000000e+00> : vector<16x32xf32>
    %15 = tpu.matmul %13, %14, %cst_6 {dimension_numbers = #tpu.dot_dimension_numbers<[1], [0], [0], [1], [0, 0, 1, 1], [], []>} : vector<16x64xbf16>, vector<64x32xbf16>, vector<16x32xf32> -> vector<16x32xf32>
    %c0_7 = arith.constant 0 : index
    %c0_8 = arith.constant 0 : index
    %16 = vector.load %arg5[%c0_7, %c0_8] : memref<16x32xf32, #tpu.memory_space<vmem>>, vector<16x32xf32>
    tpu.vector_store %arg5[%c0_7, %c0_8], %15 {strides = array<i32>} : memref<16x32xf32, #tpu.memory_space<vmem>>, vector<16x32xf32>,
    return
  }
  func.func @transform_0(%arg0: i32, %arg1: i32) -> (i32, i32) {
    %c0_i32 = arith.constant 0 : i32
    %c0_i32_0 = arith.constant 0 : i32
    return %arg0, %c0_i32 : i32, i32
  }
  func.func @transform_1(%arg0: i32, %arg1: i32) -> (i32, i32) {
    %c0_i32 = arith.constant 0 : i32
    %c0_i32_0 = arith.constant 0 : i32
    return %c0_i32, %arg1 : i32, i32
  }
  func.func @transform_2(%arg0: i32, %arg1: i32) -> (i32, i32) {
    %c0_i32 = arith.constant 0 : i32
    %c0_i32_0 = arith.constant 0 : i32
    return %arg1, %c0_i32 : i32, i32
  }
  func.func @transform_3(%arg0: i32, %arg1: i32) -> (i32, i32) {
    %c0_i32 = arith.constant 0 : i32
    %c0_i32_0 = arith.constant 0 : i32
    return %arg0, %c0_i32 : i32, i32
  }
}

</mosaic_0001>

<llo_original>
// kernel: tpu_custom_call.1
$region0: #{tpu_custom_call.1}
  #allocation0 [shape = 'u32[]', space=smem, size = 0x4, offset = 0x4, fixed_abs, tag = 'smem constant byte address 0x4 - core index']
  #allocation1 [shape = 'u32[72,128]{1,0:T(1,128)}', space=vmem, size = 0x9000, scoped, tag = 'internal scratch']
  %s0 = inlined_call_operand.vmem [shape: f32[16,32], index: 0, kind: input, shape index: {}]
  %s1 = inlined_call_operand.vmem [shape: bf16[32,128], index: 1, kind: input, shape index: {}]
  %s2 = inlined_call_operand.vmem [shape: bf16[64,32], index: 2, kind: input, shape index: {}]
  %s3 = inlined_call_operand.hbm [shape: f32[16,32], index: 3, kind: output, shape index: {}]
  %s4 = sld [smem:[#allocation0]]
  $region22: #{tpu_custom_call.1} parent=0
    _
  %s6 = ssub.s32 1, %s4
  %s7 = scalar_select 0, %s6, %s4
  $region1: #{tpu_custom_call.1} parent=0
    #allocation2 [shape = 'u8[8192]{0}', space=vmem, size = 0x2000, scoped, tag = 'output window, operand 0, single buffered']
    #allocation3 [shape = 's32[1]{0}', space=sflag, size = 0x4, scoped, tag = 'scoped memory for tpu_custom_call.1']
    %8 = vsyncpa [#allocation3], 0
    // Predicated region
    $region2: #{tpu_custom_call.1} parent=1 // pred_check
      _
    $region3: #{tpu_custom_call.1} parent=1 // pred_check_branch
      %10 = sbr.rel (0) target = $region5
    $region4: #{tpu_custom_call.1} parent=1 // pred_region
      _
    $region5: #{tpu_custom_call.1} parent=1 // pred_fallthru
      _
    // Predicated region
    $region6: #{tpu_custom_call.1} parent=1 // pred_check
      _
    $region7: #{tpu_custom_call.1} parent=1 // pred_check_branch
      %12 = sbr.rel (0) target = $region9
    $region8: #{tpu_custom_call.1} parent=1 // pred_region
      _
    $region9: #{tpu_custom_call.1} parent=1 // pred_fallthru
      _
    // Predicated region
    $region10: #{tpu_custom_call.1} parent=1 // pred_check
      _
    $region11: #{tpu_custom_call.1} parent=1 // pred_check_branch
      %14 = sbr.rel (0) target = $region13
    $region12: #{tpu_custom_call.1} parent=1 // pred_region
      _
    $region13: #{tpu_custom_call.1} parent=1 // pred_fallthru
      _
    %v16 = vld [vmem:[%s0] sm:$0xff]
    %v17 = vld [vmem:[%s0 + $0x8] sm:$0xff]
    %v18 = vpack.c.bf16 %v17, %v16
    %v19 = vld [vmem:[%s1] sm:$0xf]
    %v20 = vld [vmem:[%s1 + $0x4] sm:$0xf]
    %v21 = vld [vmem:[%s1 + $0x8] sm:$0xf]
    %v22 = vld [vmem:[%s1 + $0xc] sm:$0xf]
    %v27 = vunpack.c.l.b16 %v19
    %v28 = vunpack.c.l.b16 %v20
    %v29 = vunpack.c.l.b16 %v21
    %v30 = vunpack.c.l.b16 %v22
    %v31 = vpack.c.b16 %v28, %v27
    %v32 = vpack.c.b16 %v30, %v29
    %vm35 = vcmask 261120
    %v37 = vsel %vm35, %v18, 0
    %39 = vmatpush.bf16.msra.mxu0 0
    %40 = vmatpush.bf16.msra.mxu0 0
    %41 = vmatpush.bf16.msra.mxu0 0
    %42 = vmatpush.bf16.msra.mxu0 0
    %43 = vmatpush.bf16.msra.mxu0 0
    %44 = vmatpush.bf16.msra.mxu0 0
    %45 = vmatpush.bf16.msra.mxu0 %v32
    %46 = vmatpush.bf16.msra.mxu0 %v31
    %47 = vmatmul.bf16.gmra.mxu0 %v37
    %v48 = vpop.f32.mrf.mxu0
    %v49 = vadd.f32 0.0, %v48
    %v50 = vpop.f32.mrf.mxu0
    %v51 = vadd.f32 0.0, %v50
    %52 = vdwg.mxu0
    %v53 = vxor.u32 %v49, 2147483648
    %v54 = vxor.u32 %v51, 2147483648
    %v55 = vmul.f32 %v53, 1.442695
    %v56 = vpow.pop %v55
    %v57 = vmul.f32 %v54, 1.442695
    %v58 = vpow.pop %v57
    %v59 = vadd.f32 %v56, 1.0
    %v60 = vadd.f32 %v58, 1.0
    %v61 = vrcp.pop %v59
    %v62 = vmul.f32 %v59, %v61
    %v63 = vsub.f32 1.0, %v62
    %v64 = vmul.f32 %v61, %v63
    %v65 = vadd.f32 %v61, %v64
    %vm66 = vweird.f32 %v59
    %vm67 = vweird.f32 %v61
    %vm68 = vmor %vm66, %vm67
    %v69 = vsel %vm68, %v61, %v65
    %v70 = vand.u32 2147483647, %v59
    %vm71 = vcmp.eq.f32.partialorder %v70, 8.507059e+37
    %v72 = vand.u32 %v59, 2147483648
    %v73 = vor.u32 1.1754944e-38, %v72
    %v74 = vsel %vm71, %v73, %v69
    %v75 = vmul.f32 1.0, %v74
    %v76 = vrcp.pop %v60
    %v77 = vmul.f32 %v60, %v76
    %v78 = vsub.f32 1.0, %v77
    %v79 = vmul.f32 %v76, %v78
    %v80 = vadd.f32 %v76, %v79
    %vm81 = vweird.f32 %v60
    %vm82 = vweird.f32 %v76
    %vm83 = vmor %vm81, %vm82
    %v84 = vsel %vm83, %v76, %v80
    %v85 = vand.u32 2147483647, %v60
    %vm86 = vcmp.eq.f32.partialorder %v85, 8.507059e+37
    %v87 = vand.u32 %v60, 2147483648
    %v88 = vor.u32 1.1754944e-38, %v87
    %v89 = vsel %vm86, %v88, %v84
    %v90 = vmul.f32 1.0, %v89
    %v91 = vmul.f32 %v49, %v75
    %v92 = vmul.f32 %v51, %v90
    %95 = vrot.lane.b32.xlu0 %v49, 64
    %v96 = vpop.permute.xlu0 %95
    %97 = vrot.lane.b32.xlu0 %v51, 64
    %v98 = vpop.permute.xlu0 %97
    %v101 = vmul.f32 %v91, %v96
    %v102 = vmul.f32 %v92, %v98
    %v103 = vpack.c.bf16 %v102, %v101
    %v104 = vld [vmem:[%s2] sm:$0xf]
    %v105 = vld [vmem:[%s2 + $0x4] sm:$0xf]
    %v106 = vld [vmem:[%s2 + $0x8] sm:$0xf]
    %v107 = vld [vmem:[%s2 + $0xc] sm:$0xf]
    %v108 = vld [vmem:[%s2 + $0x10] sm:$0xf]
    %v109 = vld [vmem:[%s2 + $0x14] sm:$0xf]
    %v110 = vld [vmem:[%s2 + $0x18] sm:$0xf]
    %v111 = vld [vmem:[%s2 + $0x1c] sm:$0xf]
    %v120 = vunpack.c.l.b16 %v104
    %v121 = vunpack.c.l.b16 %v105
    %v122 = vunpack.c.l.b16 %v106
    %v123 = vunpack.c.l.b16 %v107
    %v124 = vunpack.c.l.b16 %v108
    %v125 = vunpack.c.l.b16 %v109
    %v126 = vunpack.c.l.b16 %v110
    %v127 = vunpack.c.l.b16 %v111
    %v128 = vpack.c.b16 %v121, %v120
    %v129 = vpack.c.b16 %v123, %v122
    %v130 = vpack.c.b16 %v125, %v124
    %v131 = vpack.c.b16 %v127, %v126
    %vm136 = vcmask 523264
    %v138 = vsel %vm136, %v103, 0
    %140 = vmatpush.bf16.msra.mxu0 0
    %141 = vmatpush.bf16.msra.mxu0 0
    %142 = vmatpush.bf16.msra.mxu0 0
    %143 = vmatpush.bf16.msra.mxu0 0
    %144 = vmatpush.bf16.msra.mxu0 %v131
    %145 = vmatpush.bf16.msra.mxu0 %v130
    %146 = vmatpush.bf16.msra.mxu0 %v129
    %147 = vmatpush.bf16.msra.mxu0 %v128
    %148 = vmatmul.bf16.gmra.mxu0 %v138
    %v149 = vpop.f32.mrf.mxu0
    %v150 = vadd.f32 0.0, %v149
    %v151 = vpop.f32.mrf.mxu0
    %v152 = vadd.f32 0.0, %v151
    %153 = vdwg.mxu0
    %154 = vst.msk [vmem:[#allocation2] sm:$0xff] %vm35, %v150
    %155 = vst.msk [vmem:[#allocation2 + $0x8] sm:$0xff] %vm35, %v152
    // Predicated region
    $region14: #{tpu_custom_call.1} parent=1 // pred_check
      _
    $region15: #{tpu_custom_call.1} parent=1 // pred_check_branch
      %157 = sbr.rel (0) target = $region17
    $region16: #{tpu_custom_call.1} parent=1 // pred_region
      %159 = vsyncadd [#allocation3], 0
      %s160 = sshll.u32 [#allocation2], 4
      %s161 = int_to_ptr.vmem [resolvable:$true] %s160
      %s162 = sshll.u32 %s3, 4
      %s163 = int_to_ptr.hbm [resolvable:$true] %s162
      %168 = dma.vmem_to_hbm [thread:$0]  %s161, 256, %s163, [#allocation3], 128, 128, 8
    $region17: #{tpu_custom_call.1} parent=1 // pred_fallthru
      _
    // Predicated region
    $region18: #{tpu_custom_call.1} parent=1 // pred_check
      _
    $region19: #{tpu_custom_call.1} parent=1 // pred_check_branch
      %170 = sbr.rel (0) target = $region21
    $region20: #{tpu_custom_call.1} parent=1 // pred_region
      %172 = dma.done [#allocation3], 256
    $region21: #{tpu_custom_call.1} parent=1 // pred_fallthru
      _
    %173 = vsyncpa [#allocation3], 1

</llo_original>
